<compile_context>
chip_gen: v6e
topology: v6e:2x2x1
jax: 0.10.0
libtpu: 0.0.40
codegen_flags: <defaults>
</compile_context>

<pallas_src>
import jax
import jax.numpy as jnp
from jax.experimental import pallas as pl
from jax.experimental.pallas import tpu as pltpu

HIDDEN = 32      # fc1 output width (fixed by the PyTorch module)
TB_MAX = 2048    # max batch rows per grid step


def _round_up(x, m):
    return ((x + m - 1) // m) * m


def mlp_kernel(x_ref, w1_ref, b1_ref, w2_ref, b2_ref, o_ref):
    # fc1 -> bias -> ReLU -> fc2 -> bias, fully fused on one VMEM-resident tile.
    x = x_ref[...]                                              # (TB, in)
    h = jnp.dot(x, w1_ref[...], preferred_element_type=jnp.float32)
    h = jnp.maximum(h + b1_ref[...], 0.0)                       # bias + ReLU
    q = jnp.dot(h, w2_ref[...], preferred_element_type=jnp.float32)
    o_ref[...] = (q + b2_ref[...]).astype(o_ref.dtype)          # (TB, nb_action)


def network_forward(state, w1, b1, w2, b2, *, tb_max=TB_MAX):
    """Pallas equivalent of Network.forward.

    state: (B, input_size) f32
    w1:    (input_size, 32) f32   (transposed vs PyTorch fc1.weight)
    b1:    (1, 32) f32
    w2:    (32, nb_action) f32    (transposed vs PyTorch fc2.weight)
    b2:    (1, nb_action) f32
    returns q_values: (B, nb_action) f32
    """
    B, in_size = state.shape
    nb_action = w2.shape[1]

    # --- Batch tiling -------------------------------------------------------
    # num_tiles chosen so padding stays < 8 rows per tile; for big batches
    # force >= 2 tiles so v7x's two TensorCores both get work (harmless
    # single extra grid step on v5e/v6e).
    num_tiles = pl.cdiv(B, tb_max)
    if B >= 1024:
        num_tiles = max(num_tiles, 2)
    tb = _round_up(pl.cdiv(B, num_tiles), 8)      # f32 sublane multiple
    padded_B = num_tiles * tb
    if padded_B != B:
        state = jnp.pad(state, ((0, padded_B - B), (0, 0)))
    grid = (num_tiles,)

    # --- Scheduler hint (matches the narrow-output memory profile) ----------
    flops = 2 * padded_B * (in_size * HIDDEN + HIDDEN * nb_action)
    bytes_accessed = (
        padded_B * (in_size + nb_action) * 4                       # activations in/out
        + (in_size * HIDDEN + HIDDEN + HIDDEN * nb_action + nb_action) * 4  # params
    )

    vmem = pltpu.MemorySpace.VMEM
    out = pl.pallas_call(
        mlp_kernel,
        out_shape=jax.ShapeDtypeStruct((padded_B, nb_action), jnp.float32),
        grid=grid,
        in_specs=[
            # Batch tile: marches along the grid.
            pl.BlockSpec((tb, in_size), lambda i: (i, 0), memory_space=vmem),
            # Params: grid-invariant full-array blocks -> stay VMEM-resident.
            pl.BlockSpec((in_size, HIDDEN), lambda i: (0, 0), memory_space=vmem),
            pl.BlockSpec((1, HIDDEN), lambda i: (0, 0), memory_space=vmem),
            pl.BlockSpec((HIDDEN, nb_action), lambda i: (0, 0), memory_space=vmem),
            pl.BlockSpec((1, nb_action), lambda i: (0, 0), memory_space=vmem),
        ],
        # Last dim equals the full array dim -> legal narrow block; HBM-side
        # write is contiguous and ~42x smaller than the old 128-lane slab.
        out_specs=pl.BlockSpec((tb, nb_action), lambda i: (i, 0), memory_space=vmem),
        compiler_params=pltpu.CompilerParams(
            dimension_semantics=("parallel",),  # batch tiles across TCs (v7x)
        ),
        cost_estimate=pl.CostEstimate(
            flops=int(flops), transcendentals=0, bytes_accessed=int(bytes_accessed)
        ),
    )(state, w1, b1, w2, b2)

    # Strip batch padding (output lanes already exact).
    return out[:B] if padded_B != B else out


def init_params(input_size, nb_action, seed=0):
    """Deterministic parameter init (mimics nn.Linear's uniform(-1/sqrt(fan_in), +))."""
    k = jax.random.PRNGKey(seed)
    k1, k2, k3, k4 = jax.random.split(k, 4)
    bound1 = 1.0 / jnp.sqrt(jnp.float32(input_size))
    bound2 = 1.0 / jnp.sqrt(jnp.float32(HIDDEN))
    w1 = jax.random.uniform(k1, (input_size, HIDDEN), jnp.float32, -bound1, bound1)
    b1 = jax.random.uniform(k2, (1, HIDDEN), jnp.float32, -bound1, bound1)
    w2 = jax.random.uniform(k3, (HIDDEN, nb_action), jnp.float32, -bound2, bound2)
    b2 = jax.random.uniform(k4, (1, nb_action), jnp.float32, -bound2, bound2)
    return w1, b1, w2, b2


def _ref(state, w1, b1, w2, b2):
    return jnp.maximum(state @ w1 + b1, 0.0) @ w2 + b2


if __name__ == "__main__":
    # voiture DQN shapes: input_size=5, nb_action=3.
    input_size, nb_action = 5, 3
    w1, b1, w2, b2 = init_params(input_size, nb_action, seed=0)

    key = jax.random.PRNGKey(0)
    k_small, k_mid, k_big = jax.random.split(key, 3)

    # Small batch (single grid step, tb clamped to 8) — the typical DQN case.
    state_small = jax.random.normal(k_small, (8, input_size), dtype=jnp.float32)
    q_small = jax.block_until_ready(network_forward(state_small, w1, b1, w2, b2))
    assert q_small.shape == (8, nb_action)
    assert jnp.allclose(q_small, _ref(state_small, w1, b1, w2, b2), atol=1e-5, rtol=1e-5)

    # Mid batch: single tile, no padding (1000 is a multiple of 8, < 1024).
    state_mid = jax.random.normal(k_mid, (1000, input_size), dtype=jnp.float32)
    q_mid = jax.block_until_ready(network_forward(state_mid, w1, b1, w2, b2))
    assert q_mid.shape == (1000, nb_action)
    assert jnp.allclose(q_mid, _ref(state_mid, w1, b1, w2, b2), atol=1e-5, rtol=1e-5)

    # Larger batch: exercises the >=2-tile split + minimal (<8 rows/tile) padding.
    state_big = jax.random.normal(k_big, (2500, input_size), dtype=jnp.float32)
    q_big = jax.block_until_ready(network_forward(state_big, w1, b1, w2, b2))
    assert q_big.shape == (2500, nb_action)
    assert jnp.allclose(q_big, _ref(state_big, w1, b1, w2, b2), atol=1e-5, rtol=1e-5)

    print("KERNEL_OK")
</pallas_src>

<mosaic_0001>
module attributes {stable_mosaic.version = 11 : i64} {
  func.func @mlp_kernel(%arg0: i32, %arg1: memref<8x5xf32, #tpu.memory_space<vmem>>, %arg2: memref<5x32xf32, #tpu.memory_space<vmem>>, %arg3: memref<1x32xf32, #tpu.memory_space<vmem>>, %arg4: memref<32x3xf32, #tpu.memory_space<vmem>>, %arg5: memref<1x3xf32, #tpu.memory_space<vmem>>, %arg6: memref<8x3xf32, #tpu.memory_space<vmem>>) attributes {dimension_semantics = [#tpu.dimension_semantics<parallel>], iteration_bounds = array<i64: 1>, scalar_prefetch = 0 : i64, scratch_operands = 0 : i64, tpu.core_type = #tpu.core_type<tc>, window_params = [{transform_indices = @transform_0, window_bounds = array<i64: 8, 5>}, {pipeline_mode = #tpu.pipeline_mode<synchronous>, transform_indices = @transform_1, window_bounds = array<i64: 5, 32>}, {pipeline_mode = #tpu.pipeline_mode<synchronous>, transform_indices = @transform_2, window_bounds = array<i64: 1, 32>}, {pipeline_mode = #tpu.pipeline_mode<synchronous>, transform_indices = @transform_3, window_bounds = array<i64: 32, 3>}, {pipeline_mode = #tpu.pipeline_mode<synchronous>, transform_indices = @transform_4, window_bounds = array<i64: 1, 3>}, {transform_indices = @transform_5, window_bounds = array<i64: 8, 3>}]} {
    %c0 = arith.constant 0 : index
    %c0_0 = arith.constant 0 : index
    %0 = vector.load %arg1[%c0, %c0_0] : memref<8x5xf32, #tpu.memory_space<vmem>>, vector<8x5xf32>
    %c0_1 = arith.constant 0 : index
    %c0_2 = arith.constant 0 : index
    %1 = vector.load %arg2[%c0_1, %c0_2] : memref<5x32xf32, #tpu.memory_space<vmem>>, vector<5x32xf32>
    %cst = arith.constant dense<0.000000e+00> : vector<8x32xf32>
    %2 = tpu.matmul %0, %1, %cst {dimension_numbers = #tpu.dot_dimension_numbers<[1], [0], [0], [1], [0, 0, 1, 1], [], []>} : vector<8x5xf32>, vector<5x32xf32>, vector<8x32xf32> -> vector<8x32xf32>
    %c0_3 = arith.constant 0 : index
    %c0_4 = arith.constant 0 : index
    %3 = vector.load %arg3[%c0_3, %c0_4] : memref<1x32xf32, #tpu.memory_space<vmem>>, vector<1x32xf32>
    %4 = vector.broadcast %3 : vector<1x32xf32> to vector<8x32xf32>
    %5 = arith.addf %2, %4 : vector<8x32xf32>
    %cst_5 = arith.constant 0.000000e+00 : f32
    %6 = vector.broadcast %cst_5 : f32 to vector<8x32xf32>
    %7 = arith.maximumf %5, %6 : vector<8x32xf32>
    %c0_6 = arith.constant 0 : index
    %c0_7 = arith.constant 0 : index
    %8 = vector.load %arg4[%c0_6, %c0_7] : memref<32x3xf32, #tpu.memory_space<vmem>>, vector<32x3xf32>
    %cst_8 = arith.constant dense<0.000000e+00> : vector<8x3xf32>
    %9 = tpu.matmul %7, %8, %cst_8 {dimension_numbers = #tpu.dot_dimension_numbers<[1], [0], [0], [1], [0, 0, 1, 1], [], []>} : vector<8x32xf32>, vector<32x3xf32>, vector<8x3xf32> -> vector<8x3xf32>
    %c0_9 = arith.constant 0 : index
    %c0_10 = arith.constant 0 : index
    %10 = vector.load %arg5[%c0_9, %c0_10] : memref<1x3xf32, #tpu.memory_space<vmem>>, vector<1x3xf32>
    %11 = vector.broadcast %10 : vector<1x3xf32> to vector<8x3xf32>
    %12 = arith.addf %9, %11 : vector<8x3xf32>
    %c0_11 = arith.constant 0 : index
    %c0_12 = arith.constant 0 : index
    %13 = vector.load %arg6[%c0_11, %c0_12] : memref<8x3xf32, #tpu.memory_space<vmem>>, vector<8x3xf32>
    tpu.vector_store %arg6[%c0_11, %c0_12], %12 {strides = array<i32>} : memref<8x3xf32, #tpu.memory_space<vmem>>, vector<8x3xf32>,
    return
  }
  func.func @transform_0(%arg0: i32) -> (i32, i32) {
    %c0_i32 = arith.constant 0 : i32
    %c0_i32_0 = arith.constant 0 : i32
    return %arg0, %c0_i32 : i32, i32
  }
  func.func @transform_1(%arg0: i32) -> (i32, i32) {
    %c0_i32 = arith.constant 0 : i32
    %c0_i32_0 = arith.constant 0 : i32
    %c0_i32_1 = arith.constant 0 : i32
    return %c0_i32, %c0_i32_0 : i32, i32
  }
  func.func @transform_2(%arg0: i32) -> (i32, i32) {
    %c0_i32 = arith.constant 0 : i32
    %c0_i32_0 = arith.constant 0 : i32
    %c0_i32_1 = arith.constant 0 : i32
    return %c0_i32, %c0_i32_0 : i32, i32
  }
  func.func @transform_3(%arg0: i32) -> (i32, i32) {
    %c0_i32 = arith.constant 0 : i32
    %c0_i32_0 = arith.constant 0 : i32
    %c0_i32_1 = arith.constant 0 : i32
    return %c0_i32, %c0_i32_0 : i32, i32
  }
  func.func @transform_4(%arg0: i32) -> (i32, i32) {
    %c0_i32 = arith.constant 0 : i32
    %c0_i32_0 = arith.constant 0 : i32
    %c0_i32_1 = arith.constant 0 : i32
    return %c0_i32, %c0_i32_0 : i32, i32
  }
  func.func @transform_5(%arg0: i32) -> (i32, i32) {
    %c0_i32 = arith.constant 0 : i32
    %c0_i32_0 = arith.constant 0 : i32
    return %arg0, %c0_i32 : i32, i32
  }
}

</mosaic_0001>

<llo_original>
// kernel: tpu_custom_call.1
$region0: #{tpu_custom_call.1}
  #allocation0 [shape = 'u32[]', space=smem, size = 0x4, offset = 0x4, fixed_abs, tag = 'smem constant byte address 0x4 - core index']
  #allocation1 [shape = 'u32[144,128]{1,0:T(1,128)}', space=vmem, size = 0x12000, scoped, tag = 'internal scratch']
  %s0 = inlined_call_operand.vmem [shape: f32[8,5], index: 0, kind: input, shape index: {}]
  %s1 = inlined_call_operand.vmem [shape: f32[5,32], index: 1, kind: input, shape index: {}]
  %s2 = inlined_call_operand.vmem [shape: f32[1,32], index: 2, kind: input, shape index: {}]
  %s3 = inlined_call_operand.vmem [shape: f32[32,3], index: 3, kind: input, shape index: {}]
  %s4 = inlined_call_operand.vmem [shape: f32[1,3], index: 4, kind: input, shape index: {}]
  %s5 = inlined_call_operand.vmem [shape: f32[8,3], index: 5, kind: output, shape index: {}]
  %s6 = sld [smem:[#allocation0]]
  $region30: #{tpu_custom_call.1} parent=0
    _
  %s8 = ssub.s32 1, %s6
  %s9 = scalar_select 0, %s8, %s6
  // Predicated region
  $region2: #{tpu_custom_call.1} parent=0 // pred_check
    _
  $region3: #{tpu_custom_call.1} parent=0 // pred_check_branch
    %11 = sbr.rel (0) target = $region5
  $region4: #{tpu_custom_call.1} parent=0 // pred_region
    _
  $region5: #{tpu_custom_call.1} parent=0 // pred_fallthru
    _
  // Predicated region
  $region6: #{tpu_custom_call.1} parent=0 // pred_check
    _
  $region7: #{tpu_custom_call.1} parent=0 // pred_check_branch
    %13 = sbr.rel (0) target = $region9
  $region8: #{tpu_custom_call.1} parent=0 // pred_region
    _
  $region9: #{tpu_custom_call.1} parent=0 // pred_fallthru
    _
  // Predicated region
  $region10: #{tpu_custom_call.1} parent=0 // pred_check
    _
  $region11: #{tpu_custom_call.1} parent=0 // pred_check_branch
    %15 = sbr.rel (0) target = $region13
  $region12: #{tpu_custom_call.1} parent=0 // pred_region
    _
  $region13: #{tpu_custom_call.1} parent=0 // pred_fallthru
    _
  // Predicated region
  $region14: #{tpu_custom_call.1} parent=0 // pred_check
    _
  $region15: #{tpu_custom_call.1} parent=0 // pred_check_branch
    %17 = sbr.rel (0) target = $region17
  $region16: #{tpu_custom_call.1} parent=0 // pred_region
    _
  $region17: #{tpu_custom_call.1} parent=0 // pred_fallthru
    _
  // Predicated region
  $region18: #{tpu_custom_call.1} parent=0 // pred_check
    _
  $region19: #{tpu_custom_call.1} parent=0 // pred_check_branch
    %19 = sbr.rel (0) target = $region21
  $region20: #{tpu_custom_call.1} parent=0 // pred_region
    _
  $region21: #{tpu_custom_call.1} parent=0 // pred_fallthru
    _
  %v20 = vld [vmem:[%s0] sm:$0xff]
  %v21 = vld [vmem:[%s1] sm:$0x1f]
  %v22 = vld [vmem:[%s2] sm:$0x1]
  %v24 = vlaneseq
  %v25 = vshrl.u32 %v24, 7
  %v26 = vsub.s32 0, %v25
  %v27 = vrot.slane %v22, %v26
  %vm29 = vcmask 39936
  %v31 = vsel %vm29, %v20, 0
  %vm33 = vcmask 1044480
  %v35 = vsel %vm33, %v21, 0
  %37 = vmatprep.subr.mxu0 0.0
  %38 = vmatpush1.msra.mxu0 0.0
  %39 = vmatprep.subr.mxu0 0.0
  %40 = vmatpush1.msra.mxu0 0.0
  %41 = vmatprep.subr.mxu0 0.0
  %42 = vmatpush1.msra.mxu0 0.0
  %43 = vmatprep.subr.mxu0 0.0
  %44 = vmatpush1.msra.mxu0 0.0
  %45 = vmatprep.subr.mxu0 0.0
  %46 = vmatpush1.msra.mxu0 0.0
  %47 = vmatprep.subr.mxu0 0.0
  %48 = vmatpush1.msra.mxu0 0.0
  %49 = vmatprep.subr.mxu0 0.0
  %50 = vmatpush1.msra.mxu0 0.0
  %51 = vmatprep.subr.mxu0 0.0
  %52 = vmatpush1.msra.mxu0 0.0
  %53 = vmatprep.subr.mxu0 0.0
  %54 = vmatpush1.msra.mxu0 0.0
  %55 = vmatprep.subr.mxu0 0.0
  %56 = vmatpush1.msra.mxu0 0.0
  %57 = vmatprep.subr.mxu0 0.0
  %58 = vmatpush1.msra.mxu0 0.0
  %59 = vmatprep.subr.mxu0 0.0
  %60 = vmatpush1.msra.mxu0 0.0
  %61 = vmatprep.subr.mxu0 0.0
  %62 = vmatpush1.msra.mxu0 0.0
  %63 = vmatprep.subr.mxu0 0.0
  %64 = vmatpush1.msra.mxu0 0.0
  %65 = vmatprep.subr.mxu0 0.0
  %66 = vmatpush1.msra.mxu0 0.0
  %67 = vmatprep.subr.mxu0 0.0
  %68 = vmatpush1.msra.mxu0 %v35
  %69 = vmatprep.subr.mxu0 0.0
  %70 = vmatpush2.msra.mxu0 0.0
  %71 = vmatprep.subr.mxu0 0.0
  %72 = vmatpush2.msra.mxu0 0.0
  %73 = vmatprep.subr.mxu0 0.0
  %74 = vmatpush2.msra.mxu0 0.0
  %75 = vmatprep.subr.mxu0 0.0
  %76 = vmatpush2.msra.mxu0 0.0
  %77 = vmatprep.subr.mxu0 0.0
  %78 = vmatpush2.msra.mxu0 0.0
  %79 = vmatprep.subr.mxu0 0.0
  %80 = vmatpush2.msra.mxu0 0.0
  %81 = vmatprep.subr.mxu0 0.0
  %82 = vmatpush2.msra.mxu0 0.0
  %83 = vmatprep.subr.mxu0 0.0
  %84 = vmatpush2.msra.mxu0 0.0
  %85 = vmatprep.subr.mxu0 0.0
  %86 = vmatpush2.msra.mxu0 0.0
  %87 = vmatprep.subr.mxu0 0.0
  %88 = vmatpush2.msra.mxu0 0.0
  %89 = vmatprep.subr.mxu0 0.0
  %90 = vmatpush2.msra.mxu0 0.0
  %91 = vmatprep.subr.mxu0 0.0
  %92 = vmatpush2.msra.mxu0 0.0
  %93 = vmatprep.subr.mxu0 0.0
  %94 = vmatpush2.msra.mxu0 0.0
  %95 = vmatprep.subr.mxu0 0.0
  %96 = vmatpush2.msra.mxu0 0.0
  %97 = vmatprep.subr.mxu0 0.0
  %98 = vmatpush2.msra.mxu0 0.0
  %99 = vmatprep.subr.mxu0 0.0
  %100 = vmatpush2.msra.mxu0 0.0
  %101 = vmatprep.mubr.f32.mxu0 0.0
  %102 = vmatmul.mubr.f32.gmra.mxu0 %v31
  %v103 = vpop.f32.mrf.mxu0
  %v104 = vadd.f32 %v27, %v103
  %v105 = vpop.f32.mrf.mxu0
  %106 = vdwg.mxu0
  %v107 = vmax.f32 %v104, 0.0
  %v108 = vld [vmem:[%s3] sm:$0xff]
  %v109 = vld [vmem:[%s3 + $0x8] sm:$0xff]
  %v110 = vld [vmem:[%s3 + $0x10] sm:$0xff]
  %v111 = vld [vmem:[%s3 + $0x18] sm:$0xff]
  %v112 = vld [vmem:[%s4] sm:$0x1]
  %v114 = vlaneseq
  %v115 = vshrl.u32 %v114, 7
  %v116 = vsub.s32 0, %v115
  %v117 = vrot.slane %v112, %v116
  %vm119 = vcmask 261120
  %v121 = vsel %vm119, %v107, 0
  %123 = vmatprep.subr.mxu0 0.0
  %124 = vmatpush1.msra.mxu0 0.0
  %125 = vmatprep.subr.mxu0 0.0
  %126 = vmatpush1.msra.mxu0 0.0
  %127 = vmatprep.subr.mxu0 0.0
  %128 = vmatpush1.msra.mxu0 0.0
  %129 = vmatprep.subr.mxu0 0.0
  %130 = vmatpush1.msra.mxu0 0.0
  %131 = vmatprep.subr.mxu0 0.0
  %132 = vmatpush1.msra.mxu0 0.0
  %133 = vmatprep.subr.mxu0 0.0
  %134 = vmatpush1.msra.mxu0 0.0
  %135 = vmatprep.subr.mxu0 0.0
  %136 = vmatpush1.msra.mxu0 0.0
  %137 = vmatprep.subr.mxu0 0.0
  %138 = vmatpush1.msra.mxu0 0.0
  %139 = vmatprep.subr.mxu0 0.0
  %140 = vmatpush1.msra.mxu0 0.0
  %141 = vmatprep.subr.mxu0 0.0
  %142 = vmatpush1.msra.mxu0 0.0
  %143 = vmatprep.subr.mxu0 0.0
  %144 = vmatpush1.msra.mxu0 0.0
  %145 = vmatprep.subr.mxu0 0.0
  %146 = vmatpush1.msra.mxu0 0.0
  %147 = vmatprep.subr.mxu0 0.0
  %148 = vmatpush1.msra.mxu0 %v111
  %149 = vmatprep.subr.mxu0 0.0
  %150 = vmatpush1.msra.mxu0 %v110
  %151 = vmatprep.subr.mxu0 0.0
  %152 = vmatpush1.msra.mxu0 %v109
  %153 = vmatprep.subr.mxu0 0.0
  %154 = vmatpush1.msra.mxu0 %v108
  %155 = vmatprep.subr.mxu0 0.0
  %156 = vmatpush2.msra.mxu0 0.0
  %157 = vmatprep.subr.mxu0 0.0
  %158 = vmatpush2.msra.mxu0 0.0
  %159 = vmatprep.subr.mxu0 0.0
  %160 = vmatpush2.msra.mxu0 0.0
  %161 = vmatprep.subr.mxu0 0.0
  %162 = vmatpush2.msra.mxu0 0.0
  %163 = vmatprep.subr.mxu0 0.0
  %164 = vmatpush2.msra.mxu0 0.0
  %165 = vmatprep.subr.mxu0 0.0
  %166 = vmatpush2.msra.mxu0 0.0
  %167 = vmatprep.subr.mxu0 0.0
  %168 = vmatpush2.msra.mxu0 0.0
  %169 = vmatprep.subr.mxu0 0.0
  %170 = vmatpush2.msra.mxu0 0.0
  %171 = vmatprep.subr.mxu0 0.0
  %172 = vmatpush2.msra.mxu0 0.0
  %173 = vmatprep.subr.mxu0 0.0
  %174 = vmatpush2.msra.mxu0 0.0
  %175 = vmatprep.subr.mxu0 0.0
  %176 = vmatpush2.msra.mxu0 0.0
  %177 = vmatprep.subr.mxu0 0.0
  %178 = vmatpush2.msra.mxu0 0.0
  %179 = vmatprep.subr.mxu0 0.0
  %180 = vmatpush2.msra.mxu0 0.0
  %181 = vmatprep.subr.mxu0 0.0
  %182 = vmatpush2.msra.mxu0 0.0
  %183 = vmatprep.subr.mxu0 0.0
  %184 = vmatpush2.msra.mxu0 0.0
  %185 = vmatprep.subr.mxu0 0.0
  %186 = vmatpush2.msra.mxu0 0.0
  %187 = vmatprep.mubr.f32.mxu0 0.0
  %188 = vmatmul.mubr.f32.gmra.mxu0 %v121
  %v189 = vpop.f32.mrf.mxu0
  %v190 = vadd.f32 %v117, %v189
  %v191 = vpop.f32.mrf.mxu0
  %192 = vdwg.mxu0
  %vm193 = vcmask 23552
  %194 = vst.msk [vmem:[%s5] sm:$0xff] %vm193, %v190
  // Predicated region
  $region22: #{tpu_custom_call.1} parent=0 // pred_check
    _
  $region23: #{tpu_custom_call.1} parent=0 // pred_check_branch
    %196 = sbr.rel (0) target = $region25
  $region24: #{tpu_custom_call.1} parent=0 // pred_region
    _
  $region25: #{tpu_custom_call.1} parent=0 // pred_fallthru
    _
  // Predicated region
  $region26: #{tpu_custom_call.1} parent=0 // pred_check
    _
  $region27: #{tpu_custom_call.1} parent=0 // pred_check_branch
    %198 = sbr.rel (0) target = $region29
  $region28: #{tpu_custom_call.1} parent=0 // pred_region
    _
  $region29: #{tpu_custom_call.1} parent=0 // pred_fallthru
    _

</llo_original>
